<compile_context>
chip_gen: v7x
topology: tpu7x:2x2x1
jax: 0.10.0
libtpu: 0.0.40
codegen_flags: <defaults>
</compile_context>

<pallas_src>
import functools

import jax
import jax.numpy as jnp
from jax import lax
from jax.experimental import pallas as pl
from jax.experimental.pallas import tpu as pltpu

_EPS = 1e-07
_MAX_BATCH_TILE = 16                      # bound on the in-kernel unrolled loop
_DEFAULT_BLOCK_BYTES = 2 * 1024 * 1024    # per-input-buffer budget (x2 double buffering)


@functools.lru_cache(maxsize=None)
def _roll_is_numpy_convention():
    """One-time probe: does pltpu.roll follow np.roll semantics (result[i] = x[i-shift])?

    Guarantees the stencil uses the '+1 neighbor' view regardless of the rotate
    direction convention of the installed jax/Mosaic version.
    """
    def probe_kernel(x_ref, o_ref):
        o_ref[...] = pltpu.roll(x_ref[...], x_ref.shape[-1] - 1, 1)

    x = jnp.broadcast_to(jnp.arange(128, dtype=jnp.float32), (8, 128))
    y = pl.pallas_call(
        probe_kernel, out_shape=jax.ShapeDtypeStruct((8, 128), jnp.float32)
    )(x)
    return float(y[0, 0]) == 1.0


def _incompress_kernel(vec_ref, out_ref, *, form, abs_kind, weight, numpy_roll):
    bt, _, h, w = vec_ref.shape
    absf = jnp.abs if abs_kind == "l1" else jnp.square

    # Shift amounts that realize shifted[r, c] = x[r, c+1] / x[r+1, c].
    lane_shift = (w - 1) if numpy_roll else 1
    sub_shift = (h - 1) if numpy_roll else 1

    row = lax.broadcasted_iota(jnp.int32, (h, w), 0)
    col = lax.broadcasted_iota(jnp.int32, (h, w), 1)
    interior = (row < (h - 1)) & (col < (w - 1))

    acc = jnp.zeros((h, w), jnp.float32)
    for i in range(bt):  # bt is a small static int (<= _MAX_BATCH_TILE)
        u = vec_ref[i].astype(jnp.float32)   # (2, H, W), upcast per-tile in VMEM
        ux = u[0]
        uy = u[1]

        ux_xn = pltpu.roll(ux, lane_shift, 1)   # ux[r, c+1] (wraps at boundary)
        ux_yn = pltpu.roll(ux, sub_shift, 0)    # ux[r+1, c]
        uy_xn = pltpu.roll(uy, lane_shift, 1)
        uy_yn = pltpu.roll(uy, sub_shift, 0)

        j00 = (ux_xn - ux) + 1.0
        j01 = ux_yn - ux
        j10 = uy_xn - uy
        j11 = (uy_yn - uy) + 1.0
        jdet = j00 * j11 - j01 * j10
        # Keep wrap-around boundary terms benign (no inf/nan before masking).
        jdet = jnp.where(interior, jdet, 1.0)

        if form == "abslog":
            vals = absf(jnp.log(jnp.maximum(jdet, 0.0) + _EPS)) * weight
        elif form == "abslog_diffeo":
            vals = (absf(jnp.log(jnp.maximum(jdet, 0.0) + _EPS)) * weight
                    + jnp.maximum(-jdet, 0.0))
        elif form == "minus1":
            vals = absf(jdet - 1.0) * weight
        elif form == "reciprocal":
            r = pl.reciprocal(jdet, approx=True)     # EUP slot
            r = r * (2.0 - jdet * r)                 # Newton refinement
            r = r * (2.0 - jdet * r)
            vals = jdet + r - 2.0
        else:
            raise ValueError("incompress loss form not recognized")

        acc = acc + jnp.where(interior, vals, 0.0)

    # Single cross-lane/sublane reduction per program; store a lane-dense block.
    out_ref[...] = jnp.full(out_ref.shape, jnp.sum(acc), dtype=jnp.float32)


def incompress_loss(vec, weight=1.0, form="abslog", abs="l1",
                    block_bytes=_DEFAULT_BLOCK_BYTES):
    """Pallas implementation of Incompress.forward.

    `weight` is treated as a static Python scalar (baked into the kernel).
    Returns a float32 scalar.
    """
    assert form in ("abslog", "abslog_diffeo", "minus1", "reciprocal")
    assert abs in ("l1", "l2")
    B, C, H, W = vec.shape
    assert C == 2, "expected a 2-D vector field with 2 channels (NCHW)"

    # Lane density: put the larger spatial dim on the 128-lane axis. The Jacobian
    # determinant is invariant under (swap channels, transpose H<->W).
    if W < 128 and H > W:
        vec = jnp.transpose(vec[:, ::-1], (0, 1, 3, 2))
        H, W = W, H

    itemsize = jnp.dtype(vec.dtype).itemsize
    per_image = 2 * H * W * itemsize
    bt = max(1, min(B, _MAX_BATCH_TILE, block_bytes // max(per_image, 1)))
    while B % bt != 0:
        bt -= 1
    nblocks = B // bt
    # TODO(synk): very large fields (single image > block budget) should be row-tiled
    # with a 1-row halo instead of loading the full image per grid step.

    kernel = functools.partial(
        _incompress_kernel,
        form=form, abs_kind=abs, weight=float(weight),
        numpy_roll=_roll_is_numpy_convention(),
    )

    partials = pl.pallas_call(
        kernel,
        out_shape=jax.ShapeDtypeStruct((nblocks, 8, 128), jnp.float32),
        grid_spec=pltpu.PrefetchScalarGridSpec(
            num_scalar_prefetch=0,
            grid=(nblocks,),
            in_specs=[pl.BlockSpec((bt, C, H, W), lambda b: (b, 0, 0, 0))],
            out_specs=pl.BlockSpec((1, 8, 128), lambda b: (b, 0, 0)),
        ),
        compiler_params=pltpu.CompilerParams(
            dimension_semantics=("parallel",),   # independent per-block partial sums
        ),
    )(vec)

    count = B * (H - 1) * (W - 1)
    return jnp.sum(partials[:, 0, 0]) / count


# ---------------------- pure-JAX reference (for checking) ----------------------
def _jdet_ref(vec):
    ux = vec[:, 0]
    uy = vec[:, 1]
    dux_dx = ux[:, :-1, 1:] - ux[:, :-1, :-1]
    dux_dy = ux[:, 1:, :-1] - ux[:, :-1, :-1]
    duy_dx = uy[:, :-1, 1:] - uy[:, :-1, :-1]
    duy_dy = uy[:, 1:, :-1] - uy[:, :-1, :-1]
    return (dux_dx + 1.0) * (duy_dy + 1.0) - dux_dy * duy_dx


def incompress_ref(vec, weight=1.0, form="abslog", abs="l1"):
    absf = jnp.abs if abs == "l1" else jnp.square
    jdet = _jdet_ref(vec.astype(jnp.float32))
    if form == "abslog":
        return (absf(jnp.log(jnp.maximum(jdet, 0.0) + _EPS)) * weight).mean()
    if form == "abslog_diffeo":
        return ((absf(jnp.log(jnp.maximum(jdet, 0.0) + _EPS)) * weight).mean()
                + jnp.maximum(-jdet, 0.0).mean())
    if form == "minus1":
        return (absf(jdet - 1.0) * weight).mean()
    return (jdet + 1.0 / jdet - 2.0).mean()


if __name__ == "__main__":
    key = jax.random.PRNGKey(0)
    k0, k1, k2 = jax.random.split(key, 3)

    def check(vec, form, ab, **kw):
        out = incompress_loss(vec, weight=1.0, form=form, abs=ab, **kw)
        jax.block_until_ready(out)
        ref = incompress_ref(vec, weight=1.0, form=form, abs=ab)
        assert jnp.isfinite(out), (form, ab, out)
        assert jnp.allclose(out, ref, atol=1e-5, rtol=1e-5), (form, ab, out, ref)

    # Base case: all forms / abs kinds.
    vec0 = 0.05 * jax.random.normal(k0, (2, 2, 16, 16), dtype=jnp.float32)
    for form in ("abslog", "abslog_diffeo", "minus1", "reciprocal"):
        for ab in ("l1", "l2"):
            check(vec0, form, ab)

    # Lane-sparse layout (W < H): exercises the wrapper transpose path.
    vec1 = 0.05 * jax.random.normal(k1, (2, 2, 48, 16), dtype=jnp.float32)
    check(vec1, "abslog_diffeo", "l2")
    check(vec1, "reciprocal", "l1")

    # Small block budget: multiple grid blocks with parallel partial sums.
    vec2 = 0.05 * jax.random.normal(k2, (4, 2, 24, 40), dtype=jnp.float32)
    check(vec2, "minus1", "l1", block_bytes=8 * 1024)
    check(vec2, "abslog", "l2", block_bytes=8 * 1024)

    print("KERNEL_OK")
</pallas_src>

<mosaic_0001>
module attributes {stable_mosaic.version = 11 : i64} {
  func.func @probe_kernel(%arg0: memref<8x128xf32, #tpu.memory_space<vmem>>, %arg1: memref<8x128xf32, #tpu.memory_space<vmem>>) attributes {dimension_semantics = [], scalar_prefetch = 0 : i64, scratch_operands = 0 : i64, tpu.core_type = #tpu.core_type<tc>} {
    %c0 = arith.constant 0 : index
    %c0_0 = arith.constant 0 : index
    %0 = vector.load %arg0[%c0, %c0_0] : memref<8x128xf32, #tpu.memory_space<vmem>>, vector<8x128xf32>
    %c127_i32 = arith.constant 127 : i32
    %1 = tpu.dynamic_rotate %0 by %c127_i32 dim 1 : vector<8x128xf32>, i32 -> vector<8x128xf32>
    %c0_1 = arith.constant 0 : index
    %c0_2 = arith.constant 0 : index
    %2 = vector.load %arg1[%c0_1, %c0_2] : memref<8x128xf32, #tpu.memory_space<vmem>>, vector<8x128xf32>
    tpu.vector_store %arg1[%c0_1, %c0_2], %1 {strides = array<i32>} : memref<8x128xf32, #tpu.memory_space<vmem>>, vector<8x128xf32>,
    return
  }
}

</mosaic_0001>

<llo_original>
// kernel: tpu_custom_call.1
$region0: #{tpu_custom_call.1}
  #allocation0 [shape = 'u32[]', space=smem, size = 0x4, offset = 0x4, fixed_abs, tag = 'smem constant byte address 0x4 - core index']
  #allocation1 [shape = 'u32[144,128]{1,0:T(1,128)}', space=vmem, size = 0x12000, scoped, tag = 'internal scratch']
  %s0 = inlined_call_operand.hbm [shape: f32[8,128], index: 0, kind: input, shape index: {}]
  %s1 = inlined_call_operand.hbm [shape: f32[8,128], index: 1, kind: output, shape index: {}]
  %s2 = sld [smem:[#allocation0]]
  $region18: #{tpu_custom_call.1} parent=0
    _
  %s4 = ssub.s32 1, %s2
  %s5 = scalar_select 0, %s4, %s2
  $region1: #{tpu_custom_call.1} parent=0
    #allocation2 [shape = 'u8[4096]{0}', space=vmem, size = 0x1000, scoped, tag = 'input window, operand 0, single buffered']
    #allocation3 [shape = 's32[1]{0}', space=sflag, size = 0x4, scoped, tag = 'scoped memory for tpu_custom_call.1']
    #allocation4 [shape = 's32[1]{0}', space=sflag, size = 0x4, scoped, tag = 'scoped memory for tpu_custom_call.1']
    #allocation5 [shape = 'u8[4096]{0}', space=vmem, size = 0x1000, scoped, tag = 'output window, operand 0, single buffered']
    %6 = vsyncpa [#allocation3], 0
    %7 = vsyncpa [#allocation4], 0
    // Predicated region
    $region2: #{tpu_custom_call.1} parent=1 // pred_check
      _
    $region3: #{tpu_custom_call.1} parent=1 // pred_check_branch
      %9 = sbr.rel (0) target = $region5
    $region4: #{tpu_custom_call.1} parent=1 // pred_region
      %s11 = ssub.s32 128, 128
      %12 = vsyncadd [#allocation3], %s11
      %s14 = sshll.u32 [#allocation2], 4
      %s15 = int_to_ptr.vmem [resolvable:$true] %s14
      %17 = dma.hbm_to_vmem [thread:$0]  %s0, 128, %s15, [#allocation3]
    $region5: #{tpu_custom_call.1} parent=1 // pred_fallthru
      _
    // Predicated region
    $region6: #{tpu_custom_call.1} parent=1 // pred_check
      _
    $region7: #{tpu_custom_call.1} parent=1 // pred_check_branch
      %19 = sbr.rel (0) target = $region9
    $region8: #{tpu_custom_call.1} parent=1 // pred_region
      %20 = dma.done [#allocation3], 128
    $region9: #{tpu_custom_call.1} parent=1 // pred_fallthru
      _
    %v21 = vld [vmem:[#allocation2] sm:$0xff]
    %22 = vrot.lane.b32.xlu0 %v21, 127
    %v23 = vpop.permute.xlu0 %22
    %24 = vst [vmem:[#allocation5] sm:$0xff] %v23
    // Predicated region
    $region10: #{tpu_custom_call.1} parent=1 // pred_check
      _
    $region11: #{tpu_custom_call.1} parent=1 // pred_check_branch
      %26 = sbr.rel (0) target = $region13
    $region12: #{tpu_custom_call.1} parent=1 // pred_region
      %s28 = ssub.s32 128, 128
      %29 = vsyncadd [#allocation4], %s28
      %s31 = sshll.u32 [#allocation5], 4
      %s32 = int_to_ptr.vmem [resolvable:$true] %s31
      %34 = dma.vmem_to_hbm [thread:$0]  %s32, 128, %s1, [#allocation4]
    $region13: #{tpu_custom_call.1} parent=1 // pred_fallthru
      _
    // Predicated region
    $region14: #{tpu_custom_call.1} parent=1 // pred_check
      _
    $region15: #{tpu_custom_call.1} parent=1 // pred_check_branch
      %36 = sbr.rel (0) target = $region17
    $region16: #{tpu_custom_call.1} parent=1 // pred_region
      %37 = dma.done [#allocation4], 128
    $region17: #{tpu_custom_call.1} parent=1 // pred_fallthru
      _
    %38 = vsyncpa [#allocation3], 1
    %39 = vsyncpa [#allocation4], 1

</llo_original>
